<compile_context>
chip_gen: v6e
topology: v6e:2x2x1
jax: 0.10.0
libtpu: 0.0.40
codegen_flags: <defaults>
</compile_context>

<pallas_src>
import functools

import jax
import jax.numpy as jnp
from jax.experimental import pallas as pl
from jax.experimental.pallas import tpu as pltpu

N_CLASSES = 10            # len(FashionMNIST.classes)
IN_FEATURES = 28 * 28     # 784
HIDDEN = 100
HIDDEN_PAD = 128          # 100 zero-padded to a full lane width
_SUBLANE = 8


def _round_up(x, m):
    return ((x + m - 1) // m) * m


def _mlp_kernel(x_ref, w1_ref, b1_ref, w2_ref, b2_ref, out_ref, *, mxu_dtype):
    """Whole forward pass (matmul + sigmoid + matmul + softmax) on one batch tile."""
    # x arrives straight from HBM as f32; cast to the MXU stream dtype here
    # (a VPU cast hidden under the x DMA) instead of in a separate wrapper pass.
    x = x_ref[...].astype(mxu_dtype)                              # (TB, 784)

    # fc1: x @ W1 + b1 (f32 accumulation on the MXU), then sigmoid.
    h = jnp.dot(x, w1_ref[...], preferred_element_type=jnp.float32)
    h = h + b1_ref[...]                                           # (TB, 128); b1 is (1, 128)
    # Exact sigmoid: exp rides the EUP; the divide is cheap VALU work and the
    # kernel is HBM-bound, so exactness is free.
    h = 1.0 / (1.0 + jnp.exp(-h))

    # output layer: h @ W2 + b2 (f32; tiny matmul, K=128, N=10).
    logits = jnp.dot(h, w2_ref[...], preferred_element_type=jnp.float32)
    logits = logits + b2_ref[...]                                 # (TB, 10); b2 is (1, 10)

    # Numerically stable softmax with an exact divide so rows sum to 1.
    m = jnp.max(logits, axis=-1, keepdims=True)
    e = jnp.exp(logits - m)
    out_ref[...] = e / jnp.sum(e, axis=-1, keepdims=True)


@functools.partial(jax.jit, static_argnames=("batch_tile", "use_bf16"))
def fashion_mnist_forward(x_nchw, w1, b1, w2, b2, *, batch_tile=2048, use_bf16=True):
    """x_nchw: (B, 1, 28, 28) float32. w1: (784, 100), b1: (100,), w2: (100, 10), b2: (10,).

    Returns (B, 10) softmax probabilities (float32).
    """
    assert batch_tile % _SUBLANE == 0, "batch_tile must be a multiple of 8"
    B = x_nchw.shape[0]

    # ---- glue (pure layout, stays in JAX) -----------------------------------
    x_flat = x_nchw.reshape(B, -1).astype(jnp.float32)            # (B, 784), no dtype pass

    # Minimal-padding tile selection: pick the grid first, then the smallest
    # 8-aligned tile that covers the batch with that grid.
    B8 = _round_up(B, _SUBLANE)
    grid_n = max(1, pl.cdiv(B8, batch_tile))
    tb = _round_up(pl.cdiv(B8, grid_n), _SUBLANE)
    B_pad = grid_n * tb
    if B_pad != B:
        # At most a handful of pad rows per tile; sliced off below.
        x_flat = jnp.pad(x_flat, ((0, B_pad - B), (0, 0)))

    # MXU stream dtype for the fc1 matmul. The x cast happens inside the kernel;
    # only the small, VMEM-resident W1 is cast here (one-time, ~0.3 MB).
    mxu_dtype = jnp.bfloat16 if use_bf16 else jnp.float32

    # Zero-pad hidden dim 100 -> 128 (exact: sigmoid(0) * 0 == 0 contribution).
    w1_p = jnp.pad(w1.astype(mxu_dtype), ((0, 0), (0, HIDDEN_PAD - HIDDEN)))
    b1_p = jnp.pad(b1.astype(jnp.float32), (0, HIDDEN_PAD - HIDDEN)).reshape(1, HIDDEN_PAD)
    w2_p = jnp.pad(w2.astype(jnp.float32), ((0, HIDDEN_PAD - HIDDEN), (0, 0)))
    b2_2d = b2.astype(jnp.float32).reshape(1, N_CLASSES)

    kernel = functools.partial(_mlp_kernel, mxu_dtype=mxu_dtype)

    out = pl.pallas_call(
        kernel,
        out_shape=jax.ShapeDtypeStruct((B_pad, N_CLASSES), jnp.float32),
        grid_spec=pl.GridSpec(
            grid=(grid_n,),
            in_specs=[
                pl.BlockSpec((tb, IN_FEATURES), lambda i: (i, 0)),          # x tile (f32 stream)
                pl.BlockSpec((IN_FEATURES, HIDDEN_PAD), lambda i: (0, 0)),  # W1 (VMEM-resident)
                pl.BlockSpec((1, HIDDEN_PAD), lambda i: (0, 0)),            # b1
                pl.BlockSpec((HIDDEN_PAD, N_CLASSES), lambda i: (0, 0)),    # W2
                pl.BlockSpec((1, N_CLASSES), lambda i: (0, 0)),             # b2
            ],
            out_specs=pl.BlockSpec((tb, N_CLASSES), lambda i: (i, 0)),
        ),
        compiler_params=pltpu.CompilerParams(
            dimension_semantics=("parallel",),
            vmem_limit_bytes=32 * 1024 * 1024,   # double-buffered f32 x tile @ tb=2048 fits
        ),
    )(x_flat, w1_p, b1_p, w2_p, b2_2d)

    return out[:B]


def init_params(key):
    """Deterministic init matching nn.Linear shapes (stored as (in, out))."""
    k1, k2, k3, k4 = jax.random.split(key, 4)
    # torch nn.Linear default init: U(-1/sqrt(fan_in), 1/sqrt(fan_in))
    lim1 = 1.0 / (IN_FEATURES ** 0.5)
    lim2 = 1.0 / (HIDDEN ** 0.5)
    w1 = jax.random.uniform(k1, (IN_FEATURES, HIDDEN), jnp.float32, -lim1, lim1)
    b1 = jax.random.uniform(k2, (HIDDEN,), jnp.float32, -lim1, lim1)
    w2 = jax.random.uniform(k3, (HIDDEN, N_CLASSES), jnp.float32, -lim2, lim2)
    b2 = jax.random.uniform(k4, (N_CLASSES,), jnp.float32, -lim2, lim2)
    return w1, b1, w2, b2


if __name__ == "__main__":
    key = jax.random.PRNGKey(0)
    kx, kp = jax.random.split(key)

    # small deterministic batch of "images": (B, 1, 28, 28), NCHW like torch
    B = 16
    x = jax.random.normal(kx, (B, 1, 28, 28), dtype=jnp.float32)
    w1, b1, w2, b2 = init_params(kp)

    probs = fashion_mnist_forward(x, w1, b1, w2, b2)
    probs = jax.block_until_ready(probs)

    # Pure-JAX reference using the same bf16 rounding of the fc1 MXU operands
    # (x, W1) with f32 accumulation — mirrors the kernel's MXU path.
    x_ref = x.reshape(B, -1).astype(jnp.bfloat16).astype(jnp.float32)
    w1_ref = w1.astype(jnp.bfloat16).astype(jnp.float32)
    ref = jax.nn.softmax(jax.nn.sigmoid(x_ref @ w1_ref + b1) @ w2 + b2, axis=-1)

    assert probs.shape == (B, N_CLASSES)
    # Exact divides in-kernel: rows sum to 1 to f32 rounding.
    assert jnp.allclose(jnp.sum(probs, axis=-1), 1.0, atol=1e-5)
    assert jnp.allclose(probs, ref, atol=2e-5, rtol=1e-3)

    print("KERNEL_OK")
</pallas_src>

<mosaic_0001>
module attributes {stable_mosaic.version = 11 : i64} {
  func.func @_mlp_kernel(%arg0: i32, %arg1: memref<16x784xf32, #tpu.memory_space<vmem>>, %arg2: memref<784x128xbf16, #tpu.memory_space<vmem>>, %arg3: memref<1x128xf32, #tpu.memory_space<vmem>>, %arg4: memref<128x10xf32, #tpu.memory_space<vmem>>, %arg5: memref<1x10xf32, #tpu.memory_space<vmem>>, %arg6: memref<16x10xf32, #tpu.memory_space<vmem>>) attributes {dimension_semantics = [#tpu.dimension_semantics<parallel>], iteration_bounds = array<i64: 1>, scalar_prefetch = 0 : i64, scratch_operands = 0 : i64, tpu.core_type = #tpu.core_type<tc>, window_params = [{transform_indices = @transform_0, window_bounds = array<i64: 16, 784>}, {pipeline_mode = #tpu.pipeline_mode<synchronous>, transform_indices = @transform_1, window_bounds = array<i64: 784, 128>}, {pipeline_mode = #tpu.pipeline_mode<synchronous>, transform_indices = @transform_2, window_bounds = array<i64: 1, 128>}, {pipeline_mode = #tpu.pipeline_mode<synchronous>, transform_indices = @transform_3, window_bounds = array<i64: 128, 10>}, {pipeline_mode = #tpu.pipeline_mode<synchronous>, transform_indices = @transform_4, window_bounds = array<i64: 1, 10>}, {transform_indices = @transform_5, window_bounds = array<i64: 16, 10>}]} {
    %c0 = arith.constant 0 : index
    %c0_0 = arith.constant 0 : index
    %0 = vector.load %arg1[%c0, %c0_0] : memref<16x784xf32, #tpu.memory_space<vmem>>, vector<16x784xf32>
    %1 = arith.truncf %0 : vector<16x784xf32> to vector<16x784xbf16>
    %c0_1 = arith.constant 0 : index
    %c0_2 = arith.constant 0 : index
    %2 = vector.load %arg2[%c0_1, %c0_2] : memref<784x128xbf16, #tpu.memory_space<vmem>>, vector<784x128xbf16>
    %cst = arith.constant dense<0.000000e+00> : vector<16x128xf32>
    %3 = tpu.matmul %1, %2, %cst {dimension_numbers = #tpu.dot_dimension_numbers<[1], [0], [0], [1], [0, 0, 1, 1], [], []>} : vector<16x784xbf16>, vector<784x128xbf16>, vector<16x128xf32> -> vector<16x128xf32>
    %c0_3 = arith.constant 0 : index
    %c0_4 = arith.constant 0 : index
    %4 = vector.load %arg3[%c0_3, %c0_4] : memref<1x128xf32, #tpu.memory_space<vmem>>, vector<1x128xf32>
    %5 = vector.broadcast %4 : vector<1x128xf32> to vector<16x128xf32>
    %6 = arith.addf %3, %5 : vector<16x128xf32>
    %cst_5 = arith.constant 0.000000e+00 : f32
    %7 = vector.broadcast %cst_5 : f32 to vector<16x128xf32>
    %8 = arith.subf %7, %6 : vector<16x128xf32>
    %9 = math.exp %8 : vector<16x128xf32>
    %cst_6 = arith.constant 1.000000e+00 : f32
    %10 = vector.broadcast %cst_6 : f32 to vector<16x128xf32>
    %11 = arith.addf %10, %9 : vector<16x128xf32>
    %cst_7 = arith.constant 1.000000e+00 : f32
    %12 = vector.broadcast %cst_7 : f32 to vector<16x128xf32>
    %13 = arith.divf %12, %11 : vector<16x128xf32>
    %c0_8 = arith.constant 0 : index
    %c0_9 = arith.constant 0 : index
    %14 = vector.load %arg4[%c0_8, %c0_9] : memref<128x10xf32, #tpu.memory_space<vmem>>, vector<128x10xf32>
    %cst_10 = arith.constant dense<0.000000e+00> : vector<16x10xf32>
    %15 = tpu.matmul %13, %14, %cst_10 {dimension_numbers = #tpu.dot_dimension_numbers<[1], [0], [0], [1], [0, 0, 1, 1], [], []>} : vector<16x128xf32>, vector<128x10xf32>, vector<16x10xf32> -> vector<16x10xf32>
    %c0_11 = arith.constant 0 : index
    %c0_12 = arith.constant 0 : index
    %16 = vector.load %arg5[%c0_11, %c0_12] : memref<1x10xf32, #tpu.memory_space<vmem>>, vector<1x10xf32>
    %17 = vector.broadcast %16 : vector<1x10xf32> to vector<16x10xf32>
    %18 = arith.addf %15, %17 : vector<16x10xf32>
    %cst_13 = arith.constant dense<0xFF800000> : vector<16xf32>
    %19 = vector.multi_reduction <maximumf>, %18, %cst_13 [1] : vector<16x10xf32> to vector<16xf32>
    %20 = vector.shape_cast %19 : vector<16xf32> to vector<16x1xf32>
    %21 = vector.broadcast %20 : vector<16x1xf32> to vector<16x10xf32>
    %22 = arith.subf %18, %21 : vector<16x10xf32>
    %23 = math.exp %22 : vector<16x10xf32>
    %cst_14 = arith.constant dense<0.000000e+00> : vector<16xf32>
    %24 = vector.multi_reduction <add>, %23, %cst_14 [1] : vector<16x10xf32> to vector<16xf32>
    %25 = vector.shape_cast %24 : vector<16xf32> to vector<16x1xf32>
    %26 = vector.broadcast %25 : vector<16x1xf32> to vector<16x10xf32>
    %27 = arith.divf %23, %26 : vector<16x10xf32>
    %c0_15 = arith.constant 0 : index
    %c0_16 = arith.constant 0 : index
    %28 = vector.load %arg6[%c0_15, %c0_16] : memref<16x10xf32, #tpu.memory_space<vmem>>, vector<16x10xf32>
    tpu.vector_store %arg6[%c0_15, %c0_16], %27 {strides = array<i32>} : memref<16x10xf32, #tpu.memory_space<vmem>>, vector<16x10xf32>,
    return
  }
  func.func @transform_0(%arg0: i32) -> (i32, i32) {
    %c0_i32 = arith.constant 0 : i32
    %c0_i32_0 = arith.constant 0 : i32
    return %arg0, %c0_i32 : i32, i32
  }
  func.func @transform_1(%arg0: i32) -> (i32, i32) {
    %c0_i32 = arith.constant 0 : i32
    %c0_i32_0 = arith.constant 0 : i32
    %c0_i32_1 = arith.constant 0 : i32
    return %c0_i32, %c0_i32_0 : i32, i32
  }
  func.func @transform_2(%arg0: i32) -> (i32, i32) {
    %c0_i32 = arith.constant 0 : i32
    %c0_i32_0 = arith.constant 0 : i32
    %c0_i32_1 = arith.constant 0 : i32
    return %c0_i32, %c0_i32_0 : i32, i32
  }
  func.func @transform_3(%arg0: i32) -> (i32, i32) {
    %c0_i32 = arith.constant 0 : i32
    %c0_i32_0 = arith.constant 0 : i32
    %c0_i32_1 = arith.constant 0 : i32
    return %c0_i32, %c0_i32_0 : i32, i32
  }
  func.func @transform_4(%arg0: i32) -> (i32, i32) {
    %c0_i32 = arith.constant 0 : i32
    %c0_i32_0 = arith.constant 0 : i32
    %c0_i32_1 = arith.constant 0 : i32
    return %c0_i32, %c0_i32_0 : i32, i32
  }
  func.func @transform_5(%arg0: i32) -> (i32, i32) {
    %c0_i32 = arith.constant 0 : i32
    %c0_i32_0 = arith.constant 0 : i32
    return %arg0, %c0_i32 : i32, i32
  }
}

</mosaic_0001>

<llo_original>
// kernel: fashion_mnist_forward.1
$region0: #{fashion_mnist_forward.1}
  #allocation0 [shape = 'u32[]', space=smem, size = 0x4, offset = 0x4, fixed_abs, tag = 'smem constant byte address 0x4 - core index']
  #allocation1 [shape = 'u32[144,128]{1,0:T(1,128)}', space=vmem, size = 0x12000, scoped, tag = 'internal scratch']
  %s0 = inlined_call_operand.vmem [shape: f32[16,784], index: 0, kind: input, shape index: {}]
  %s1 = inlined_call_operand.vmem [shape: bf16[784,128], index: 1, kind: input, shape index: {}]
  %s2 = inlined_call_operand.vmem [shape: f32[1,128], index: 2, kind: input, shape index: {}]
  %s3 = inlined_call_operand.vmem [shape: f32[128,10], index: 3, kind: input, shape index: {}]
  %s4 = inlined_call_operand.vmem [shape: f32[1,10], index: 4, kind: input, shape index: {}]
  %s5 = inlined_call_operand.hbm [shape: f32[16,10], index: 5, kind: output, shape index: {}]
  %s6 = sld [smem:[#allocation0]]
  $region30: #{fashion_mnist_forward.1} parent=0
    _
  %s8 = ssub.s32 1, %s6
  %s9 = scalar_select 0, %s8, %s6
  $region1: #{fashion_mnist_forward.1} parent=0
    #allocation2 [shape = 'u8[8192]{0}', space=vmem, size = 0x2000, scoped, tag = 'output window, operand 0, single buffered']
    #allocation3 [shape = 's32[1]{0}', space=sflag, size = 0x4, scoped, tag = 'scoped memory for fashion_mnist_forward.1']
    %10 = vsyncpa [#allocation3], 0
    // Predicated region
    $region2: #{fashion_mnist_forward.1} parent=1 // pred_check
      _
    $region3: #{fashion_mnist_forward.1} parent=1 // pred_check_branch
      %12 = sbr.rel (0) target = $region5
    $region4: #{fashion_mnist_forward.1} parent=1 // pred_region
      _
    $region5: #{fashion_mnist_forward.1} parent=1 // pred_fallthru
      _
    // Predicated region
    $region6: #{fashion_mnist_forward.1} parent=1 // pred_check
      _
    $region7: #{fashion_mnist_forward.1} parent=1 // pred_check_branch
      %14 = sbr.rel (0) target = $region9
    $region8: #{fashion_mnist_forward.1} parent=1 // pred_region
      _
    $region9: #{fashion_mnist_forward.1} parent=1 // pred_fallthru
      _
    // Predicated region
    $region10: #{fashion_mnist_forward.1} parent=1 // pred_check
      _
    $region11: #{fashion_mnist_forward.1} parent=1 // pred_check_branch
      %16 = sbr.rel (0) target = $region13
    $region12: #{fashion_mnist_forward.1} parent=1 // pred_region
      _
    $region13: #{fashion_mnist_forward.1} parent=1 // pred_fallthru
      _
    // Predicated region
    $region14: #{fashion_mnist_forward.1} parent=1 // pred_check
      _
    $region15: #{fashion_mnist_forward.1} parent=1 // pred_check_branch
      %18 = sbr.rel (0) target = $region17
    $region16: #{fashion_mnist_forward.1} parent=1 // pred_region
      _
    $region17: #{fashion_mnist_forward.1} parent=1 // pred_fallthru
      _
    // Predicated region
    $region18: #{fashion_mnist_forward.1} parent=1 // pred_check
      _
    $region19: #{fashion_mnist_forward.1} parent=1 // pred_check_branch
      %20 = sbr.rel (0) target = $region21
    $region20: #{fashion_mnist_forward.1} parent=1 // pred_region
      _
    $region21: #{fashion_mnist_forward.1} parent=1 // pred_fallthru
      _
    %v22 = vld [vmem:[%s0] sm:$0xff]
    %v23 = vld [vmem:[%s0 + $0x8] sm:$0xff]
    %v24 = vld [vmem:[%s0 + $0x10] sm:$0xff]
    %v25 = vld [vmem:[%s0 + $0x18] sm:$0xff]
    %v26 = vld [vmem:[%s0 + $0x20] sm:$0xff]
    %v27 = vld [vmem:[%s0 + $0x28] sm:$0xff]
    %v28 = vld [vmem:[%s0 + $0x30] sm:$0xff]
    %v29 = vld [vmem:[%s0 + $0x38] sm:$0xff]
    %v30 = vld [vmem:[%s0 + $0x40] sm:$0xff]
    %v31 = vld [vmem:[%s0 + $0x48] sm:$0xff]
    %v32 = vld [vmem:[%s0 + $0x50] sm:$0xff]
    %v33 = vld [vmem:[%s0 + $0x58] sm:$0xff]
    %v34 = vld [vmem:[%s0 + $0x60] sm:$0xff]
    %v35 = vld [vmem:[%s0 + $0x68] sm:$0xff]
    %v36 = vpack.c.bf16 %v29, %v22
    %v37 = vpack.c.bf16 %v30, %v23
    %v38 = vpack.c.bf16 %v31, %v24
    %v39 = vpack.c.bf16 %v32, %v25
    %v40 = vpack.c.bf16 %v33, %v26
    %v41 = vpack.c.bf16 %v34, %v27
    %v42 = vpack.c.bf16 %v35, %v28
    %v43 = vld [vmem:[%s1] sm:$0xf]
    %v44 = vld [vmem:[%s1 + $0x4] sm:$0xf]
    %v45 = vld [vmem:[%s1 + $0x8] sm:$0xf]
    %v46 = vld [vmem:[%s1 + $0xc] sm:$0xf]
    %v47 = vld [vmem:[%s1 + $0x10] sm:$0xf]
    %v48 = vld [vmem:[%s1 + $0x14] sm:$0xf]
    %v49 = vld [vmem:[%s1 + $0x18] sm:$0xf]
    %v50 = vld [vmem:[%s1 + $0x1c] sm:$0xf]
    %v51 = vld [vmem:[%s1 + $0x20] sm:$0xf]
    %v52 = vld [vmem:[%s1 + $0x24] sm:$0xf]
    %v53 = vld [vmem:[%s1 + $0x28] sm:$0xf]
    %v54 = vld [vmem:[%s1 + $0x2c] sm:$0xf]
    %v55 = vld [vmem:[%s1 + $0x30] sm:$0xf]
    %v56 = vld [vmem:[%s1 + $0x34] sm:$0xf]
    %v57 = vld [vmem:[%s1 + $0x38] sm:$0xf]
    %v58 = vld [vmem:[%s1 + $0x3c] sm:$0xf]
    %v59 = vld [vmem:[%s1 + $0x40] sm:$0xf]
    %v60 = vld [vmem:[%s1 + $0x44] sm:$0xf]
    %v61 = vld [vmem:[%s1 + $0x48] sm:$0xf]
    %v62 = vld [vmem:[%s1 + $0x4c] sm:$0xf]
    %v63 = vld [vmem:[%s1 + $0x50] sm:$0xf]
    %v64 = vld [vmem:[%s1 + $0x54] sm:$0xf]
    %v65 = vld [vmem:[%s1 + $0x58] sm:$0xf]
    %v66 = vld [vmem:[%s1 + $0x5c] sm:$0xf]
    %v67 = vld [vmem:[%s1 + $0x60] sm:$0xf]
    %v68 = vld [vmem:[%s1 + $0x64] sm:$0xf]
    %v69 = vld [vmem:[%s1 + $0x68] sm:$0xf]
    %v70 = vld [vmem:[%s1 + $0x6c] sm:$0xf]
    %v71 = vld [vmem:[%s1 + $0x70] sm:$0xf]
    %v72 = vld [vmem:[%s1 + $0x74] sm:$0xf]
    %v73 = vld [vmem:[%s1 + $0x78] sm:$0xf]
    %v74 = vld [vmem:[%s1 + $0x7c] sm:$0xf]
    %v75 = vld [vmem:[%s1 + $0x80] sm:$0xf]
    %v76 = vld [vmem:[%s1 + $0x84] sm:$0xf]
    %v77 = vld [vmem:[%s1 + $0x88] sm:$0xf]
    %v78 = vld [vmem:[%s1 + $0x8c] sm:$0xf]
    %v79 = vld [vmem:[%s1 + $0x90] sm:$0xf]
    %v80 = vld [vmem:[%s1 + $0x94] sm:$0xf]
    %v81 = vld [vmem:[%s1 + $0x98] sm:$0xf]
    %v82 = vld [vmem:[%s1 + $0x9c] sm:$0xf]
    %v83 = vld [vmem:[%s1 + $0xa0] sm:$0xf]
    %v84 = vld [vmem:[%s1 + $0xa4] sm:$0xf]
    %v85 = vld [vmem:[%s1 + $0xa8] sm:$0xf]
    %v86 = vld [vmem:[%s1 + $0xac] sm:$0xf]
    %v87 = vld [vmem:[%s1 + $0xb0] sm:$0xf]
    %v88 = vld [vmem:[%s1 + $0xb4] sm:$0xf]
    %v89 = vld [vmem:[%s1 + $0xb8] sm:$0xf]
    %v90 = vld [vmem:[%s1 + $0xbc] sm:$0xf]
    %v91 = vld [vmem:[%s1 + $0xc0] sm:$0xf]
    %v92 = vld [vmem:[%s1 + $0xc4] sm:$0xf]
    %v93 = vld [vmem:[%s1 + $0xc8] sm:$0xf]
    %v94 = vld [vmem:[%s1 + $0xcc] sm:$0xf]
    %v95 = vld [vmem:[%s1 + $0xd0] sm:$0xf]
    %v96 = vld [vmem:[%s1 + $0xd4] sm:$0xf]
    %v97 = vld [vmem:[%s1 + $0xd8] sm:$0xf]
    %v98 = vld [vmem:[%s1 + $0xdc] sm:$0xf]
    %v99 = vld [vmem:[%s1 + $0xe0] sm:$0xf]
    %v100 = vld [vmem:[%s1 + $0xe4] sm:$0xf]
    %v101 = vld [vmem:[%s1 + $0xe8] sm:$0xf]
    %v102 = vld [vmem:[%s1 + $0xec] sm:$0xf]
    %v103 = vld [vmem:[%s1 + $0xf0] sm:$0xf]
    %v104 = vld [vmem:[%s1 + $0xf4] sm:$0xf]
    %v105 = vld [vmem:[%s1 + $0xf8] sm:$0xf]
    %v106 = vld [vmem:[%s1 + $0xfc] sm:$0xf]
    %v107 = vld [vmem:[%s1 + $0x100] sm:$0xf]
    %v108 = vld [vmem:[%s1 + $0x104] sm:$0xf]
    %v109 = vld [vmem:[%s1 + $0x108] sm:$0xf]
    %v110 = vld [vmem:[%s1 + $0x10c] sm:$0xf]
    %v111 = vld [vmem:[%s1 + $0x110] sm:$0xf]
    %v112 = vld [vmem:[%s1 + $0x114] sm:$0xf]
    %v113 = vld [vmem:[%s1 + $0x118] sm:$0xf]
    %v114 = vld [vmem:[%s1 + $0x11c] sm:$0xf]
    %v115 = vld [vmem:[%s1 + $0x120] sm:$0xf]
    %v116 = vld [vmem:[%s1 + $0x124] sm:$0xf]
    %v117 = vld [vmem:[%s1 + $0x128] sm:$0xf]
    %v118 = vld [vmem:[%s1 + $0x12c] sm:$0xf]
    %v119 = vld [vmem:[%s1 + $0x130] sm:$0xf]
    %v120 = vld [vmem:[%s1 + $0x134] sm:$0xf]
    %v121 = vld [vmem:[%s1 + $0x138] sm:$0xf]
    %v122 = vld [vmem:[%s1 + $0x13c] sm:$0xf]
    %v123 = vld [vmem:[%s1 + $0x140] sm:$0xf]
    %v124 = vld [vmem:[%s1 + $0x144] sm:$0xf]
    %v125 = vld [vmem:[%s1 + $0x148] sm:$0xf]
    %v126 = vld [vmem:[%s1 + $0x14c] sm:$0xf]
    %v127 = vld [vmem:[%s1 + $0x150] sm:$0xf]
    %v128 = vld [vmem:[%s1 + $0x154] sm:$0xf]
    %v129 = vld [vmem:[%s1 + $0x158] sm:$0xf]
    %v130 = vld [vmem:[%s1 + $0x15c] sm:$0xf]
    %v131 = vld [vmem:[%s1 + $0x160] sm:$0xf]
    %v132 = vld [vmem:[%s1 + $0x164] sm:$0xf]
    %v133 = vld [vmem:[%s1 + $0x168] sm:$0xf]
    %v134 = vld [vmem:[%s1 + $0x16c] sm:$0xf]
    %v135 = vld [vmem:[%s1 + $0x170] sm:$0xf]
    %v136 = vld [vmem:[%s1 + $0x174] sm:$0xf]
    %v137 = vld [vmem:[%s1 + $0x178] sm:$0xf]
    %v138 = vld [vmem:[%s1 + $0x17c] sm:$0xf]
    %v139 = vld [vmem:[%s1 + $0x180] sm:$0xf]
    %v140 = vld [vmem:[%s1 + $0x184] sm:$0xf]
    %v141 = vld [vmem:[%s2] sm:$0x1]
    %v143 = vlaneseq
    %v144 = vshrl.u32 %v143, 7
    %v145 = vsub.s32 0, %v144
    %v146 = vrot.slane %v141, %v145
    %v246 = vunpack.c.l.b16 %v43
    %v247 = vunpack.c.l.b16 %v44
    %v248 = vunpack.c.l.b16 %v45
    %v249 = vunpack.c.l.b16 %v46
    %v250 = vunpack.c.l.b16 %v47
    %v251 = vunpack.c.l.b16 %v48
    %v252 = vunpack.c.l.b16 %v49
    %v253 = vunpack.c.l.b16 %v50
    %v254 = vunpack.c.l.b16 %v51
    %v255 = vunpack.c.l.b16 %v52
    %v256 = vunpack.c.l.b16 %v53
    %v257 = vunpack.c.l.b16 %v54
    %v258 = vunpack.c.l.b16 %v55
    %v259 = vunpack.c.l.b16 %v56
    %v260 = vunpack.c.l.b16 %v57
    %v261 = vunpack.c.l.b16 %v58
    %v262 = vunpack.c.l.b16 %v59
    %v263 = vunpack.c.l.b16 %v60
    %v264 = vunpack.c.l.b16 %v61
    %v265 = vunpack.c.l.b16 %v62
    %v266 = vunpack.c.l.b16 %v63
    %v267 = vunpack.c.l.b16 %v64
    %v268 = vunpack.c.l.b16 %v65
    %v269 = vunpack.c.l.b16 %v66
    %v270 = vunpack.c.l.b16 %v67
    %v271 = vunpack.c.l.b16 %v68
    %v272 = vunpack.c.l.b16 %v69
    %v273 = vunpack.c.l.b16 %v70
    %v274 = vunpack.c.l.b16 %v71
    %v275 = vunpack.c.l.b16 %v72
    %v276 = vunpack.c.l.b16 %v73
    %v277 = vunpack.c.l.b16 %v74
    %v278 = vunpack.c.l.b16 %v75
    %v279 = vunpack.c.l.b16 %v76
    %v280 = vunpack.c.l.b16 %v77
    %v281 = vunpack.c.l.b16 %v78
    %v282 = vunpack.c.l.b16 %v79
    %v283 = vunpack.c.l.b16 %v80
    %v284 = vunpack.c.l.b16 %v81
    %v285 = vunpack.c.l.b16 %v82
    %v286 = vunpack.c.l.b16 %v83
    %v287 = vunpack.c.l.b16 %v84
    %v288 = vunpack.c.l.b16 %v85
    %v289 = vunpack.c.l.b16 %v86
    %v290 = vunpack.c.l.b16 %v87
    %v291 = vunpack.c.l.b16 %v88
    %v292 = vunpack.c.l.b16 %v89
    %v293 = vunpack.c.l.b16 %v90
    %v294 = vunpack.c.l.b16 %v91
    %v295 = vunpack.c.l.b16 %v92
    %v296 = vunpack.c.l.b16 %v93
    %v297 = vunpack.c.l.b16 %v94
    %v298 = vunpack.c.l.b16 %v95
    %v299 = vunpack.c.l.b16 %v96
    %v300 = vunpack.c.l.b16 %v97
    %v301 = vunpack.c.l.b16 %v98
    %v302 = vunpack.c.l.b16 %v99
    %v303 = vunpack.c.l.b16 %v100
    %v304 = vunpack.c.l.b16 %v101
    %v305 = vunpack.c.l.b16 %v102
    %v306 = vunpack.c.l.b16 %v103
    %v307 = vunpack.c.l.b16 %v104
    %v308 = vunpack.c.l.b16 %v105
    %v309 = vunpack.c.l.b16 %v106
    %v310 = vunpack.c.l.b16 %v107
    %v311 = vunpack.c.l.b16 %v108
    %v312 = vunpack.c.l.b16 %v109
    %v313 = vunpack.c.l.b16 %v110
    %v314 = vunpack.c.l.b16 %v111
    %v315 = vunpack.c.l.b16 %v112
    %v316 = vunpack.c.l.b16 %v113
    %v317 = vunpack.c.l.b16 %v114
    %v318 = vunpack.c.l.b16 %v115
    %v319 = vunpack.c.l.b16 %v116
    %v320 = vunpack.c.l.b16 %v117
    %v321 = vunpack.c.l.b16 %v118
    %v322 = vunpack.c.l.b16 %v119
    %v323 = vunpack.c.l.b16 %v120
    %v324 = vunpack.c.l.b16 %v121
    %v325 = vunpack.c.l.b16 %v122
    %v326 = vunpack.c.l.b16 %v123
    %v327 = vunpack.c.l.b16 %v124
    %v328 = vunpack.c.l.b16 %v125
    %v329 = vunpack.c.l.b16 %v126
    %v330 = vunpack.c.l.b16 %v127
    %v331 = vunpack.c.l.b16 %v128
    %v332 = vunpack.c.l.b16 %v129
    %v333 = vunpack.c.l.b16 %v130
    %v334 = vunpack.c.l.b16 %v131
    %v335 = vunpack.c.l.b16 %v132
    %v336 = vunpack.c.l.b16 %v133
    %v337 = vunpack.c.l.b16 %v134
    %v338 = vunpack.c.l.b16 %v135
    %v339 = vunpack.c.l.b16 %v136
    %v340 = vunpack.c.l.b16 %v137
    %v341 = vunpack.c.l.b16 %v138
    %v342 = vunpack.c.l.b16 %v139
    %v343 = vunpack.c.l.b16 %v140
    %v344 = vpack.c.b16 %v247, %v246
    %v345 = vpack.c.b16 %v249, %v248
    %v346 = vpack.c.b16 %v251, %v250
    %v347 = vpack.c.b16 %v253, %v252
    %v348 = vpack.c.b16 %v255, %v254
    %v349 = vpack.c.b16 %v257, %v256
    %v350 = vpack.c.b16 %v259, %v258
    %v351 = vpack.c.b16 %v261, %v260
    %v352 = vpack.c.b16 %v263, %v262
    %v353 = vpack.c.b16 %v265, %v264
    %v354 = vpack.c.b16 %v267, %v266
    %v355 = vpack.c.b16 %v269, %v268
    %v356 = vpack.c.b16 %v271, %v270
    %v357 = vpack.c.b16 %v273, %v272
    %v358 = vpack.c.b16 %v275, %v274
    %v359 = vpack.c.b16 %v277, %v276
    %v360 = vpack.c.b16 %v279, %v278
    %v361 = vpack.c.b16 %v281, %v280
    %v362 = vpack.c.b16 %v283, %v282
    %v363 = vpack.c.b16 %v285, %v284
    %v364 = vpack.c.b16 %v287, %v286
    %v365 = vpack.c.b16 %v289, %v288
    %v366 = vpack.c.b16 %v291, %v290
    %v367 = vpack.c.b16 %v293, %v292
    %v368 = vpack.c.b16 %v295, %v294
    %v369 = vpack.c.b16 %v297, %v296
    %v370 = vpack.c.b16 %v299, %v298
    %v371 = vpack.c.b16 %v301, %v300
    %v372 = vpack.c.b16 %v303, %v302
    %v373 = vpack.c.b16 %v305, %v304
    %v374 = vpack.c.b16 %v307, %v306
    %v375 = vpack.c.b16 %v309, %v308
    %v376 = vpack.c.b16 %v311, %v310
    %v377 = vpack.c.b16 %v313, %v312
    %v378 = vpack.c.b16 %v315, %v314
    %v379 = vpack.c.b16 %v317, %v316
    %v380 = vpack.c.b16 %v319, %v318
    %v381 = vpack.c.b16 %v321, %v320
    %v382 = vpack.c.b16 %v323, %v322
    %v383 = vpack.c.b16 %v325, %v324
    %v384 = vpack.c.b16 %v327, %v326
    %v385 = vpack.c.b16 %v329, %v328
    %v386 = vpack.c.b16 %v331, %v330
    %v387 = vpack.c.b16 %v333, %v332
    %v388 = vpack.c.b16 %v335, %v334
    %v389 = vpack.c.b16 %v337, %v336
    %v390 = vpack.c.b16 %v339, %v338
    %v391 = vpack.c.b16 %v341, %v340
    %v392 = vpack.c.b16 %v343, %v342
    %vm442 = vcmask 130048
    %v444 = vsel %vm442, %v42, 0
    %446 = vmatprep.subr.bf16.mxu0 0
    %447 = vmatpush1.bf16.msra.mxu0 %v351
    %448 = vmatprep.subr.bf16.mxu0 0
    %449 = vmatpush1.bf16.msra.mxu0 %v350
    %450 = vmatprep.subr.bf16.mxu0 0
    %451 = vmatpush1.bf16.msra.mxu0 %v349
    %452 = vmatprep.subr.bf16.mxu0 0
    %453 = vmatpush1.bf16.msra.mxu0 %v348
    %454 = vmatprep.subr.bf16.mxu0 0
    %455 = vmatpush1.bf16.msra.mxu0 %v347
    %456 = vmatprep.subr.bf16.mxu0 0
    %457 = vmatpush1.bf16.msra.mxu0 %v346
    %458 = vmatprep.subr.bf16.mxu0 0
    %459 = vmatpush1.bf16.msra.mxu0 %v345
    %460 = vmatprep.subr.bf16.mxu0 0
    %461 = vmatpush1.bf16.msra.mxu0 %v344
    %462 = vmatprep.subr.bf16.mxu0 0
    %463 = vmatpush2.bf16.msra.mxu0 %v359
    %464 = vmatprep.subr.bf16.mxu0 0
    %465 = vmatpush2.bf16.msra.mxu0 %v358
    %466 = vmatprep.subr.bf16.mxu0 0
    %467 = vmatpush2.bf16.msra.mxu0 %v357
    %468 = vmatprep.subr.bf16.mxu0 0
    %469 = vmatpush2.bf16.msra.mxu0 %v356
    %470 = vmatprep.subr.bf16.mxu0 0
    %471 = vmatpush2.bf16.msra.mxu0 %v355
    %472 = vmatprep.subr.bf16.mxu0 0
    %473 = vmatpush2.bf16.msra.mxu0 %v354
    %474 = vmatprep.subr.bf16.mxu0 0
    %475 = vmatpush2.bf16.msra.mxu0 %v353
    %476 = vmatprep.subr.bf16.mxu0 0
    %477 = vmatpush2.bf16.msra.mxu0 %v352
    %478 = vmatprep.mubr.bf16.mxu0 %v37
    %479 = vmatmul.mubr.bf16.gmra.mxu0 %v36
    %v480 = vpop.f32.mrf.mxu0
    %v481 = vadd.f32 %v146, %v480
    %v482 = vpop.f32.mrf.mxu0
    %v483 = vpop.f32.mrf.mxu0
    %v484 = vadd.f32 %v146, %v483
    %v485 = vpop.f32.mrf.mxu0
    %486 = vdwg.mxu0
    %487 = vmatprep.subr.bf16.mxu0 0
    %488 = vmatpush1.bf16.msra.mxu0 %v367
    %489 = vmatprep.subr.bf16.mxu0 0
    %490 = vmatpush1.bf16.msra.mxu0 %v366
    %491 = vmatprep.subr.bf16.mxu0 0
    %492 = vmatpush1.bf16.msra.mxu0 %v365
    %493 = vmatprep.subr.bf16.mxu0 0
    %494 = vmatpush1.bf16.msra.mxu0 %v364
    %495 = vmatprep.subr.bf16.mxu0 0
    %496 = vmatpush1.bf16.msra.mxu0 %v363
    %497 = vmatprep.subr.bf16.mxu0 0
    %498 = vmatpush1.bf16.msra.mxu0 %v362
    %499 = vmatprep.subr.bf16.mxu0 0
    %500 = vmatpush1.bf16.msra.mxu0 %v361
    %501 = vmatprep.subr.bf16.mxu0 0
    %502 = vmatpush1.bf16.msra.mxu0 %v360
    %503 = vmatprep.subr.bf16.mxu0 0
    %504 = vmatpush2.bf16.msra.mxu0 %v375
    %505 = vmatprep.subr.bf16.mxu0 0
    %506 = vmatpush2.bf16.msra.mxu0 %v374
    %507 = vmatprep.subr.bf16.mxu0 0
    %508 = vmatpush2.bf16.msra.mxu0 %v373
    %509 = vmatprep.subr.bf16.mxu0 0
    %510 = vmatpush2.bf16.msra.mxu0 %v372
    %511 = vmatprep.subr.bf16.mxu0 0
    %512 = vmatpush2.bf16.msra.mxu0 %v371
    %513 = vmatprep.subr.bf16.mxu0 0
    %514 = vmatpush2.bf16.msra.mxu0 %v370
    %515 = vmatprep.subr.bf16.mxu0 0
    %516 = vmatpush2.bf16.msra.mxu0 %v369
    %517 = vmatprep.subr.bf16.mxu0 0
    %518 = vmatpush2.bf16.msra.mxu0 %v368
    %519 = vmatprep.mubr.bf16.mxu0 %v39
    %520 = vmatmul.mubr.bf16.gmra.mxu0 %v38
    %v521 = vpop.f32.mrf.mxu0
    %v522 = vadd.f32 %v481, %v521
    %v523 = vpop.f32.mrf.mxu0
    %v524 = vpop.f32.mrf.mxu0
    %v525 = vadd.f32 %v484, %v524
    %v526 = vpop.f32.mrf.mxu0
    %527 = vdwg.mxu0
    %528 = vmatprep.subr.bf16.mxu0 0
    %529 = vmatpush1.bf16.msra.mxu0 %v383
    %530 = vmatprep.subr.bf16.mxu0 0
    %531 = vmatpush1.bf16.msra.mxu0 %v382
    %532 = vmatprep.subr.bf16.mxu0 0
    %533 = vmatpush1.bf16.msra.mxu0 %v381
    %534 = vmatprep.subr.bf16.mxu0 0
    %535 = vmatpush1.bf16.msra.mxu0 %v380
    %536 = vmatprep.subr.bf16.mxu0 0
    %537 = vmatpush1.bf16.msra.mxu0 %v379
    %538 = vmatprep.subr.bf16.mxu0 0
    %539 = vmatpush1.bf16.msra.mxu0 %v378
    %540 = vmatprep.subr.bf16.mxu0 0
    %541 = vmatpush1.bf16.msra.mxu0 %v377
    %542 = vmatprep.subr.bf16.mxu0 0
    %543 = vmatpush1.bf16.msra.mxu0 %v376
    %544 = vmatprep.subr.bf16.mxu0 0
    %545 = vmatpush2.bf16.msra.mxu0 %v391
    %546 = vmatprep.subr.bf16.mxu0 0
    %547 = vmatpush2.bf16.msra.mxu0 %v390
    %548 = vmatprep.subr.bf16.mxu0 0
    %549 = vmatpush2.bf16.msra.mxu0 %v389
    %550 = vmatprep.subr.bf16.mxu0 0
    %551 = vmatpush2.bf16.msra.mxu0 %v388
    %552 = vmatprep.subr.bf16.mxu0 0
    %553 = vmatpush2.bf16.msra.mxu0 %v387
    %554 = vmatprep.subr.bf16.mxu0 0
    %555 = vmatpush2.bf16.msra.mxu0 %v386
    %556 = vmatprep.subr.bf16.mxu0 0
    %557 = vmatpush2.bf16.msra.mxu0 %v385
    %558 = vmatprep.subr.bf16.mxu0 0
    %559 = vmatpush2.bf16.msra.mxu0 %v384
    %560 = vmatprep.mubr.bf16.mxu0 %v41
    %561 = vmatmul.mubr.bf16.gmra.mxu0 %v40
    %v562 = vpop.f32.mrf.mxu0
    %v563 = vadd.f32 %v522, %v562
    %v564 = vpop.f32.mrf.mxu0
    %v565 = vpop.f32.mrf.mxu0
    %v566 = vadd.f32 %v525, %v565
    %v567 = vpop.f32.mrf.mxu0
    %568 = vdwg.mxu0
    %569 = vmatprep.subr.bf16.mxu0 0
    %570 = vmatpush1.bf16.msra.mxu0 0
    %571 = vmatprep.subr.bf16.mxu0 0
    %572 = vmatpush1.bf16.msra.mxu0 0
    %573 = vmatprep.subr.bf16.mxu0 0
    %574 = vmatpush1.bf16.msra.mxu0 0
    %575 = vmatprep.subr.bf16.mxu0 0
    %576 = vmatpush1.bf16.msra.mxu0 0
    %577 = vmatprep.subr.bf16.mxu0 0
    %578 = vmatpush1.bf16.msra.mxu0 0
    %579 = vmatprep.subr.bf16.mxu0 0
    %580 = vmatpush1.bf16.msra.mxu0 0
    %581 = vmatprep.subr.bf16.mxu0 0
    %582 = vmatpush1.bf16.msra.mxu0 0
    %583 = vmatprep.subr.bf16.mxu0 0
    %584 = vmatpush1.bf16.msra.mxu0 %v392
    %585 = vmatprep.subr.bf16.mxu0 0
    %586 = vmatpush2.bf16.msra.mxu0 0
    %587 = vmatprep.subr.bf16.mxu0 0
    %588 = vmatpush2.bf16.msra.mxu0 0
    %589 = vmatprep.subr.bf16.mxu0 0
    %590 = vmatpush2.bf16.msra.mxu0 0
    %591 = vmatprep.subr.bf16.mxu0 0
    %592 = vmatpush2.bf16.msra.mxu0 0
    %593 = vmatprep.subr.bf16.mxu0 0
    %594 = vmatpush2.bf16.msra.mxu0 0
    %595 = vmatprep.subr.bf16.mxu0 0
    %596 = vmatpush2.bf16.msra.mxu0 0
    %597 = vmatprep.subr.bf16.mxu0 0
    %598 = vmatpush2.bf16.msra.mxu0 0
    %599 = vmatprep.subr.bf16.mxu0 0
    %600 = vmatpush2.bf16.msra.mxu0 0
    %601 = vmatprep.mubr.bf16.mxu0 0
    %602 = vmatmul.mubr.bf16.gmra.mxu0 %v444
    %v603 = vpop.f32.mrf.mxu0
    %v604 = vadd.f32 %v563, %v603
    %v605 = vpop.f32.mrf.mxu0
    %v606 = vpop.f32.mrf.mxu0
    %v607 = vadd.f32 %v566, %v606
    %v608 = vpop.f32.mrf.mxu0
    %609 = vdwg.mxu0
    %v610 = vsub.f32 0.0, %v604
    %v611 = vsub.f32 0.0, %v607
    %v612 = vmul.f32 %v610, 1.442695
    %v613 = vpow.pop %v612
    %v614 = vmul.f32 %v611, 1.442695
    %v615 = vpow.pop %v614
    %v616 = vadd.f32 %v613, 1.0
    %v617 = vadd.f32 %v615, 1.0
    %v618 = vrcp.pop %v616
    %v619 = vmul.f32 1.0, %v618
    %v620 = vrcp.pop %v617
    %v621 = vmul.f32 1.0, %v620
    %v622 = vld [vmem:[%s3] sm:$0xff]
    %v623 = vld [vmem:[%s3 + $0x8] sm:$0xff]
    %v624 = vld [vmem:[%s3 + $0x10] sm:$0xff]
    %v625 = vld [vmem:[%s3 + $0x18] sm:$0xff]
    %v626 = vld [vmem:[%s3 + $0x20] sm:$0xff]
    %v627 = vld [vmem:[%s3 + $0x28] sm:$0xff]
    %v628 = vld [vmem:[%s3 + $0x30] sm:$0xff]
    %v629 = vld [vmem:[%s3 + $0x38] sm:$0xff]
    %v630 = vld [vmem:[%s3 + $0x40] sm:$0xff]
    %v631 = vld [vmem:[%s3 + $0x48] sm:$0xff]
    %v632 = vld [vmem:[%s3 + $0x50] sm:$0xff]
    %v633 = vld [vmem:[%s3 + $0x58] sm:$0xff]
    %v634 = vld [vmem:[%s3 + $0x60] sm:$0xff]
    %v635 = vld [vmem:[%s3 + $0x68] sm:$0xff]
    %v636 = vld [vmem:[%s3 + $0x70] sm:$0xff]
    %v637 = vld [vmem:[%s3 + $0x78] sm:$0xff]
    %v638 = vld [vmem:[%s4] sm:$0x1]
    %v640 = vlaneseq
    %v641 = vshrl.u32 %v640, 7
    %v642 = vsub.s32 0, %v641
    %v643 = vrot.slane %v638, %v642
    %645 = vmatprep.subr.mxu0 0.0
    %646 = vmatpush1.msra.mxu0 %v637
    %647 = vmatprep.subr.mxu0 0.0
    %648 = vmatpush1.msra.mxu0 %v636
    %649 = vmatprep.subr.mxu0 0.0
    %650 = vmatpush1.msra.mxu0 %v635
    %651 = vmatprep.subr.mxu0 0.0
    %652 = vmatpush1.msra.mxu0 %v634
    %653 = vmatprep.subr.mxu0 0.0
    %654 = vmatpush1.msra.mxu0 %v633
    %655 = vmatprep.subr.mxu0 0.0
    %656 = vmatpush1.msra.mxu0 %v632
    %657 = vmatprep.subr.mxu0 0.0
    %658 = vmatpush1.msra.mxu0 %v631
    %659 = vmatprep.subr.mxu0 0.0
    %660 = vmatpush1.msra.mxu0 %v630
    %661 = vmatprep.subr.mxu0 0.0
    %662 = vmatpush1.msra.mxu0 %v629
    %663 = vmatprep.subr.mxu0 0.0
    %664 = vmatpush1.msra.mxu0 %v628
    %665 = vmatprep.subr.mxu0 0.0
    %666 = vmatpush1.msra.mxu0 %v627
    %667 = vmatprep.subr.mxu0 0.0
    %668 = vmatpush1.msra.mxu0 %v626
    %669 = vmatprep.subr.mxu0 0.0
    %670 = vmatpush1.msra.mxu0 %v625
    %671 = vmatprep.subr.mxu0 0.0
    %672 = vmatpush1.msra.mxu0 %v624
    %673 = vmatprep.subr.mxu0 0.0
    %674 = vmatpush1.msra.mxu0 %v623
    %675 = vmatprep.subr.mxu0 0.0
    %676 = vmatpush1.msra.mxu0 %v622
    %677 = vmatprep.subr.mxu0 0.0
    %678 = vmatpush2.msra.mxu0 0.0
    %679 = vmatprep.subr.mxu0 0.0
    %680 = vmatpush2.msra.mxu0 0.0
    %681 = vmatprep.subr.mxu0 0.0
    %682 = vmatpush2.msra.mxu0 0.0
    %683 = vmatprep.subr.mxu0 0.0
    %684 = vmatpush2.msra.mxu0 0.0
    %685 = vmatprep.subr.mxu0 0.0
    %686 = vmatpush2.msra.mxu0 0.0
    %687 = vmatprep.subr.mxu0 0.0
    %688 = vmatpush2.msra.mxu0 0.0
    %689 = vmatprep.subr.mxu0 0.0
    %690 = vmatpush2.msra.mxu0 0.0
    %691 = vmatprep.subr.mxu0 0.0
    %692 = vmatpush2.msra.mxu0 0.0
    %693 = vmatprep.subr.mxu0 0.0
    %694 = vmatpush2.msra.mxu0 0.0
    %695 = vmatprep.subr.mxu0 0.0
    %696 = vmatpush2.msra.mxu0 0.0
    %697 = vmatprep.subr.mxu0 0.0
    %698 = vmatpush2.msra.mxu0 0.0
    %699 = vmatprep.subr.mxu0 0.0
    %700 = vmatpush2.msra.mxu0 0.0
    %701 = vmatprep.subr.mxu0 0.0
    %702 = vmatpush2.msra.mxu0 0.0
    %703 = vmatprep.subr.mxu0 0.0
    %704 = vmatpush2.msra.mxu0 0.0
    %705 = vmatprep.subr.mxu0 0.0
    %706 = vmatpush2.msra.mxu0 0.0
    %707 = vmatprep.subr.mxu0 0.0
    %708 = vmatpush2.msra.mxu0 0.0
    %709 = vmatprep.mubr.f32.mxu0 0.0
    %710 = vmatmul.mubr.f32.gmra.mxu0 %v619
    %v711 = vpop.f32.mrf.mxu0
    %v712 = vadd.f32 %v643, %v711
    %v713 = vpop.f32.mrf.mxu0
    %714 = vmatprep.mubr.f32.mxu0 0.0
    %715 = vmatmul.mubr.f32.gmra.mxu0 %v621
    %v716 = vpop.f32.mrf.mxu0
    %v717 = vadd.f32 %v643, %v716
    %v718 = vpop.f32.mrf.mxu0
    %719 = vdwg.mxu0
    %vm720 = vcmask 80896
    %v721 = vsel %vm720, %v712, -inf
    %722 = vmax.xlane.f32.xlu0 %v721
    %v723 = vpop.xlane.xlu0 %722
    %v724 = vsel %vm720, %v717, -inf
    %725 = vmax.xlane.f32.xlu0 %v724
    %v726 = vpop.xlane.xlu0 %725
    %v727 = vsub.f32 %v712, %v723
    %v728 = vsub.f32 %v717, %v726
    %v729 = vmul.f32 %v727, 1.442695
    %v730 = vpow.pop %v729
    %v731 = vmul.f32 %v728, 1.442695
    %v732 = vpow.pop %v731
    %v733 = vsel %vm720, %v730, 0.0
    %734 = vadd.xlane.f32.xlu0 %v733
    %v735 = vpop.xlane.xlu0 %734
    %v736 = vsel %vm720, %v732, 0.0
    %737 = vadd.xlane.f32.xlu0 %v736
    %v738 = vpop.xlane.xlu0 %737
    %v739 = vrcp.pop %v735
    %v740 = vmul.f32 %v730, %v739
    %v741 = vrcp.pop %v738
    %v742 = vmul.f32 %v732, %v741
    %743 = vst.msk [vmem:[#allocation2] sm:$0xff] %vm720, %v740
    %744 = vst.msk [vmem:[#allocation2 + $0x8] sm:$0xff] %vm720, %v742
    // Predicated region
    $region22: #{fashion_mnist_forward.1} parent=1 // pred_check
      _
    $region23: #{fashion_mnist_forward.1} parent=1 // pred_check_branch
      %746 = sbr.rel (0) target = $region25
    $region24: #{fashion_mnist_forward.1} parent=1 // pred_region
      %s748 = ssub.s32 256, 256
      %749 = vsyncadd [#allocation3], %s748
      %s750 = sshll.u32 [#allocation2], 4
      %s751 = int_to_ptr.vmem [resolvable:$true] %s750
      %756 = dma.vmem_to_hbm [thread:$0]  %s751, 256, %s5, [#allocation3], 128, 128, 8
    $region25: #{fashion_mnist_forward.1} parent=1 // pred_fallthru
      _
    // Predicated region
    $region26: #{fashion_mnist_forward.1} parent=1 // pred_check
      _
    $region27: #{fashion_mnist_forward.1} parent=1 // pred_check_branch
      %758 = sbr.rel (0) target = $region29
    $region28: #{fashion_mnist_forward.1} parent=1 // pred_region
      %759 = dma.done [#allocation3], 256
    $region29: #{fashion_mnist_forward.1} parent=1 // pred_fallthru
      _
    %760 = vsyncpa [#allocation3], 1

</llo_original>
